<compile_context>
chip_gen: v7x
topology: tpu7x:2x2x1
jax: 0.10.0
libtpu: 0.0.40
codegen_flags: <defaults>
</compile_context>

<pallas_src>
import jax
import jax.numpy as jnp
from jax.experimental import pallas as pl
from jax.experimental.pallas import tpu as pltpu

# ----- fused-layout constants ------------------------------------------------
_IN_DIM = 130
_S1 = 256                      # fused stage-1 width (one MXU pass)
_L2H1 = 100                    # l2 first hidden         -> cols [0, 100)
_L1_OFF = 128                  # l1 hidden, 128-aligned  -> cols [128, 168)
_L1H = 40
_X0P_COL = _L1_OFF + _L1H      # +x0                     -> col 168
_X0N_COL = _X0P_COL + 1        # -x0                     -> col 169

_S2 = 128                      # fused stage-2 width
_L2H2 = 20                     # l2 second hidden        -> cols [0, 20)
_X1P_COL = _L2H2               # +x1                     -> col 20
_X1N_COL = _L2H2 + 1           # -x1                     -> col 21
_X0P_COL2 = _L2H2 + 2          # +x0 passthrough         -> col 22
_X0N_COL2 = _L2H2 + 3          # -x0 passthrough         -> col 23
_B2P_COL = _L2H2 + 4           # +l2 final bias          -> col 24
_B2N_COL = _L2H2 + 5           # -l2 final bias          -> col 25


def _cnnseq_kernel(x_ref, w1_ref, b1_ref, w2_ref, b2_ref, w3_ref, o_ref):
    # Cast the f32 tile to bf16 in-kernel (VPU has slack; HBM streams f32 once).
    x = x_ref[...].astype(jnp.bfloat16)                              # (TB, 130)

    # Stage 1: fused [l2[0] | l1[0] | +x0 | -x0] -- bf16 MXU, f32 accumulate.
    h = jnp.dot(x, w1_ref[...], preferred_element_type=jnp.float32)  # (TB, 256)
    h = jnp.maximum(h + b1_ref[...], 0.0)                            # plain ReLU

    # Stage 2: fused [l2[1] | +-x1 | +-x0 passthrough | +-l2 final bias].
    z = jnp.dot(h.astype(jnp.bfloat16), w2_ref[...],
                preferred_element_type=jnp.float32)                  # (TB, 128)
    z = jnp.maximum(z + b2_ref[...], 0.0)                            # plain ReLU

    # Stage 3: final projection as W3 @ z^T (standard A@B^T contraction), so
    # the batch lands on lanes and the (1, TB) output tile is lane-dense.
    s = jax.lax.dot_general(w3_ref[...], z.astype(jnp.bfloat16),
                            (((1,), (1,)), ((), ())),
                            preferred_element_type=jnp.float32)      # (1, TB)

    # sigmoid(s) == 0.5 * (tanh(s/2) + 1): tanh runs on the EUP, saturates
    # cleanly for large |s| (no inf/NaN corner cases).
    o_ref[...] = 0.5 * jnp.tanh(0.5 * s) + 0.5


def _round_up(n, m):
    return ((n + m - 1) // m) * m


def _choose_tile(b, block_rows):
    """Pick (tile_rows, grid_steps): big tiles to amortize per-step overhead,
    >=2 steps (>=4 for larger B) so v7x megacore shards the batch, minimal
    wasted rows in the ragged tail (handled by Pallas block clamping)."""
    nsteps = pl.cdiv(b, block_rows)
    if b > 1024:
        nsteps = max(nsteps, 4)
    elif b > 256:
        nsteps = max(nsteps, 2)
    rows = pl.cdiv(b, nsteps)
    tb = _round_up(rows, 128) if rows >= 128 else _round_up(rows, 8)
    grid_b = pl.cdiv(b, tb)
    return tb, grid_b


def _fuse_params(p):
    """Build the fused/padded weight slabs described in the header comment.
    Scalars that must skip ReLU ride through as (+v, -v) column pairs."""
    w1 = jnp.zeros((_IN_DIM, _S1), jnp.float32)
    w1 = w1.at[:, :_L2H1].set(p["l2_w0"])
    w1 = w1.at[:, _L1_OFF:_L1_OFF + _L1H].set(p["l1_w0"])
    w1 = w1.at[:, _X0P_COL].set(p["l0_w0"][:, 0])
    w1 = w1.at[:, _X0N_COL].set(-p["l0_w0"][:, 0])

    b1 = jnp.zeros((1, _S1), jnp.float32)
    b1 = b1.at[0, :_L2H1].set(p["l2_b0"])
    b1 = b1.at[0, _L1_OFF:_L1_OFF + _L1H].set(p["l1_b0"])
    b1 = b1.at[0, _X0P_COL].set(p["l0_b0"][0])
    b1 = b1.at[0, _X0N_COL].set(-p["l0_b0"][0])

    w2 = jnp.zeros((_S1, _S2), jnp.float32)
    w2 = w2.at[:_L2H1, :_L2H2].set(p["l2_w1"])
    w2 = w2.at[_L1_OFF:_L1_OFF + _L1H, _X1P_COL].set(p["l1_w1"][:, 0])
    w2 = w2.at[_L1_OFF:_L1_OFF + _L1H, _X1N_COL].set(-p["l1_w1"][:, 0])
    w2 = w2.at[_X0P_COL, _X0P_COL2].set(1.0)
    w2 = w2.at[_X0N_COL, _X0N_COL2].set(1.0)

    b2 = jnp.zeros((1, _S2), jnp.float32)
    b2 = b2.at[0, :_L2H2].set(p["l2_b1"])
    b2 = b2.at[0, _X1P_COL].set(p["l1_b1"][0])
    b2 = b2.at[0, _X1N_COL].set(-p["l1_b1"][0])
    b2 = b2.at[0, _B2P_COL].set(p["l2_b2"][0])
    b2 = b2.at[0, _B2N_COL].set(-p["l2_b2"][0])

    w3 = jnp.zeros((1, _S2), jnp.float32)
    w3 = w3.at[0, :_L2H2].set(p["l2_w2"][:, 0])
    w3 = w3.at[0, _X1P_COL].set(1.0)
    w3 = w3.at[0, _X1N_COL].set(-1.0)
    w3 = w3.at[0, _X0P_COL2].set(1.0)
    w3 = w3.at[0, _X0N_COL2].set(-1.0)
    w3 = w3.at[0, _B2P_COL].set(1.0)
    w3 = w3.at[0, _B2N_COL].set(-1.0)

    # All MXU operands in bf16 (weights and biases' +-1 routing values are
    # exact in bf16); biases stay f32 and are added to the f32 accumulators.
    return (w1.astype(jnp.bfloat16), b1,
            w2.astype(jnp.bfloat16), b2,
            w3.astype(jnp.bfloat16))


def cnnseq_forward(x, params, *, block_rows=4096,
                   vmem_limit_bytes=48 * 1024 * 1024):
    """x: (B, 1, 130) f32 -> (B,) f32 sigmoid outputs."""
    x2d = jnp.squeeze(x, axis=1)                                 # (B, 130) f32
    b, d = x2d.shape
    assert d == _IN_DIM

    tb, grid_b = _choose_tile(b, block_rows)
    w1, b1, w2, b2, w3 = _fuse_params(params)

    out = pl.pallas_call(
        _cnnseq_kernel,
        out_shape=jax.ShapeDtypeStruct((grid_b, 1, tb), jnp.float32),
        grid=(grid_b,),
        in_specs=[
            # x tile: f32 straight from HBM; the ragged last tile is clamped
            # by Pallas (OOB rows are garbage, isolated per-row, sliced off).
            pl.BlockSpec((tb, _IN_DIM), lambda i: (i, 0)),
            pl.BlockSpec((_IN_DIM, _S1), lambda i: (0, 0)),      # fused stage-1 W (bf16)
            pl.BlockSpec((1, _S1), lambda i: (0, 0)),            # fused stage-1 b (f32)
            pl.BlockSpec((_S1, _S2), lambda i: (0, 0)),          # fused stage-2 W (bf16)
            pl.BlockSpec((1, _S2), lambda i: (0, 0)),            # fused stage-2 b (f32)
            pl.BlockSpec((1, _S2), lambda i: (0, 0)),            # fused final W (bf16)
        ],
        out_specs=pl.BlockSpec((None, 1, tb), lambda i: (i, 0, 0)),
        compiler_params=pltpu.CompilerParams(
            dimension_semantics=("parallel",),
            vmem_limit_bytes=vmem_limit_bytes),
    )(x2d, w1, b1, w2, b2, w3)

    return out.reshape(grid_b * tb)[:b]


def init_params(key):
    """Deterministic synthetic init. Weights (in, out); biases (out,)."""
    def linear(k, fan_in, fan_out):
        kw, kb = jax.random.split(k)
        bound = 1.0 / jnp.sqrt(float(fan_in))
        w = jax.random.uniform(kw, (fan_in, fan_out), jnp.float32, -bound, bound)
        b = jax.random.uniform(kb, (fan_out,), jnp.float32, -bound, bound)
        return w, b

    keys = jax.random.split(key, 6)
    p = {}
    p["l2_w0"], p["l2_b0"] = linear(keys[0], 130, 100)
    p["l2_w1"], p["l2_b1"] = linear(keys[1], 100, 20)
    p["l2_w2"], p["l2_b2"] = linear(keys[2], 20, 1)
    p["l1_w0"], p["l1_b0"] = linear(keys[3], 130, 40)
    p["l1_w1"], p["l1_b1"] = linear(keys[4], 40, 1)
    p["l0_w0"], p["l0_b0"] = linear(keys[5], 130, 1)
    return p


def _reference_forward(x, p):
    """Pure-JAX f32 reference for sanity checking."""
    x2d = jnp.squeeze(x, axis=1)
    h = jax.nn.relu(x2d @ p["l2_w0"] + p["l2_b0"])
    h = jax.nn.relu(h @ p["l2_w1"] + p["l2_b1"])
    x2 = (h @ p["l2_w2"] + p["l2_b2"])[:, 0]
    g = jax.nn.relu(x2d @ p["l1_w0"] + p["l1_b0"])
    x1 = (g @ p["l1_w1"] + p["l1_b1"])[:, 0]
    x0 = (x2d @ p["l0_w0"] + p["l0_b0"])[:, 0]
    return jax.nn.sigmoid(x2 + x1 + x0)


if __name__ == "__main__":
    key = jax.random.PRNGKey(0)
    k_params, k_x1, k_x2 = jax.random.split(key, 3)
    params = init_params(k_params)

    # Small single-tile case (B = 8).
    x_small = jax.random.normal(k_x1, (8, 1, 130), dtype=jnp.float32)
    out_small = jax.block_until_ready(cnnseq_forward(x_small, params))
    ref_small = _reference_forward(x_small, params)
    assert out_small.shape == (8,)
    assert jnp.allclose(out_small, ref_small, atol=2e-2, rtol=2e-2), (
        float(jnp.max(jnp.abs(out_small - ref_small))))

    # Multi-tile case: batch grid + ragged tail tile (B=300, TB=128, 3 steps).
    x_big = jax.random.normal(k_x2, (300, 1, 130), dtype=jnp.float32)
    out_big = jax.block_until_ready(
        cnnseq_forward(x_big, params, block_rows=128))
    ref_big = _reference_forward(x_big, params)
    assert out_big.shape == (300,)
    assert jnp.allclose(out_big, ref_big, atol=2e-2, rtol=2e-2), (
        float(jnp.max(jnp.abs(out_big - ref_big))))

    # Default tile selection: forces >=2 grid steps (megacore) with a ragged
    # last tile (B=300 -> TB=256, 2 steps).
    out_def = jax.block_until_ready(cnnseq_forward(x_big, params))
    assert out_def.shape == (300,)
    assert jnp.allclose(out_def, ref_big, atol=2e-2, rtol=2e-2), (
        float(jnp.max(jnp.abs(out_def - ref_big))))

    print("KERNEL_OK")
</pallas_src>

<mosaic_0001>
module attributes {stable_mosaic.version = 11 : i64} {
  func.func @_cnnseq_kernel(%arg0: i32, %arg1: memref<8x130xf32, #tpu.memory_space<vmem>>, %arg2: memref<130x256xbf16, #tpu.memory_space<vmem>>, %arg3: memref<1x256xf32, #tpu.memory_space<vmem>>, %arg4: memref<256x128xbf16, #tpu.memory_space<vmem>>, %arg5: memref<1x128xf32, #tpu.memory_space<vmem>>, %arg6: memref<1x128xbf16, #tpu.memory_space<vmem>>, %arg7: memref<1x1x8xf32, #tpu.memory_space<vmem>>) attributes {dimension_semantics = [#tpu.dimension_semantics<parallel>], iteration_bounds = array<i64: 1>, scalar_prefetch = 0 : i64, scratch_operands = 0 : i64, tpu.core_type = #tpu.core_type<tc>, window_params = [{transform_indices = @transform_0, window_bounds = array<i64: 8, 130>}, {pipeline_mode = #tpu.pipeline_mode<synchronous>, transform_indices = @transform_1, window_bounds = array<i64: 130, 256>}, {pipeline_mode = #tpu.pipeline_mode<synchronous>, transform_indices = @transform_2, window_bounds = array<i64: 1, 256>}, {pipeline_mode = #tpu.pipeline_mode<synchronous>, transform_indices = @transform_3, window_bounds = array<i64: 256, 128>}, {pipeline_mode = #tpu.pipeline_mode<synchronous>, transform_indices = @transform_4, window_bounds = array<i64: 1, 128>}, {pipeline_mode = #tpu.pipeline_mode<synchronous>, transform_indices = @transform_5, window_bounds = array<i64: 1, 128>}, {transform_indices = @transform_6, window_bounds = array<i64: 1, 1, 8>}]} {
    %c0 = arith.constant 0 : index
    %c0_0 = arith.constant 0 : index
    %0 = vector.load %arg1[%c0, %c0_0] : memref<8x130xf32, #tpu.memory_space<vmem>>, vector<8x130xf32>
    %1 = arith.truncf %0 : vector<8x130xf32> to vector<8x130xbf16>
    %c0_1 = arith.constant 0 : index
    %c0_2 = arith.constant 0 : index
    %2 = vector.load %arg2[%c0_1, %c0_2] : memref<130x256xbf16, #tpu.memory_space<vmem>>, vector<130x256xbf16>
    %cst = arith.constant dense<0.000000e+00> : vector<8x256xf32>
    %3 = tpu.matmul %1, %2, %cst {dimension_numbers = #tpu.dot_dimension_numbers<[1], [0], [0], [1], [0, 0, 1, 1], [], []>} : vector<8x130xbf16>, vector<130x256xbf16>, vector<8x256xf32> -> vector<8x256xf32>
    %c0_3 = arith.constant 0 : index
    %c0_4 = arith.constant 0 : index
    %4 = vector.load %arg3[%c0_3, %c0_4] : memref<1x256xf32, #tpu.memory_space<vmem>>, vector<1x256xf32>
    %5 = vector.broadcast %4 : vector<1x256xf32> to vector<8x256xf32>
    %6 = arith.addf %3, %5 : vector<8x256xf32>
    %cst_5 = arith.constant 0.000000e+00 : f32
    %7 = vector.broadcast %cst_5 : f32 to vector<8x256xf32>
    %8 = arith.maximumf %6, %7 : vector<8x256xf32>
    %9 = arith.truncf %8 : vector<8x256xf32> to vector<8x256xbf16>
    %c0_6 = arith.constant 0 : index
    %c0_7 = arith.constant 0 : index
    %10 = vector.load %arg4[%c0_6, %c0_7] : memref<256x128xbf16, #tpu.memory_space<vmem>>, vector<256x128xbf16>
    %cst_8 = arith.constant dense<0.000000e+00> : vector<8x128xf32>
    %11 = tpu.matmul %9, %10, %cst_8 {dimension_numbers = #tpu.dot_dimension_numbers<[1], [0], [0], [1], [0, 0, 1, 1], [], []>} : vector<8x256xbf16>, vector<256x128xbf16>, vector<8x128xf32> -> vector<8x128xf32>
    %c0_9 = arith.constant 0 : index
    %c0_10 = arith.constant 0 : index
    %12 = vector.load %arg5[%c0_9, %c0_10] : memref<1x128xf32, #tpu.memory_space<vmem>>, vector<1x128xf32>
    %13 = vector.broadcast %12 : vector<1x128xf32> to vector<8x128xf32>
    %14 = arith.addf %11, %13 : vector<8x128xf32>
    %cst_11 = arith.constant 0.000000e+00 : f32
    %15 = vector.broadcast %cst_11 : f32 to vector<8x128xf32>
    %16 = arith.maximumf %14, %15 : vector<8x128xf32>
    %c0_12 = arith.constant 0 : index
    %c0_13 = arith.constant 0 : index
    %17 = vector.load %arg6[%c0_12, %c0_13] : memref<1x128xbf16, #tpu.memory_space<vmem>>, vector<1x128xbf16>
    %18 = arith.truncf %16 : vector<8x128xf32> to vector<8x128xbf16>
    %cst_14 = arith.constant dense<0.000000e+00> : vector<1x8xf32>
    %19 = tpu.matmul %17, %18, %cst_14 {dimension_numbers = #tpu.dot_dimension_numbers<[1], [1], [0], [0], [0, 0, 1, 0], [], []>} : vector<1x128xbf16>, vector<8x128xbf16>, vector<1x8xf32> -> vector<1x8xf32>
    %cst_15 = arith.constant 5.000000e-01 : f32
    %20 = vector.broadcast %cst_15 : f32 to vector<1x8xf32>
    %21 = arith.mulf %20, %19 : vector<1x8xf32>
    %22 = math.tanh %21 : vector<1x8xf32>
    %cst_16 = arith.constant 5.000000e-01 : f32
    %23 = vector.broadcast %cst_16 : f32 to vector<1x8xf32>
    %24 = arith.mulf %23, %22 : vector<1x8xf32>
    %cst_17 = arith.constant 5.000000e-01 : f32
    %25 = vector.broadcast %cst_17 : f32 to vector<1x8xf32>
    %26 = arith.addf %24, %25 : vector<1x8xf32>
    %c0_18 = arith.constant 0 : index
    %c0_19 = arith.constant 0 : index
    %c0_20 = arith.constant 0 : index
    %27 = vector.load %arg7[%c0_18, %c0_19, %c0_20] : memref<1x1x8xf32, #tpu.memory_space<vmem>>, vector<1x1x8xf32>
    %28 = vector.shape_cast %27 : vector<1x1x8xf32> to vector<1x8xf32>
    %29 = vector.shape_cast %26 : vector<1x8xf32> to vector<1x1x8xf32>
    tpu.vector_store %arg7[%c0_18, %c0_19, %c0_20], %29 {strides = array<i32>} : memref<1x1x8xf32, #tpu.memory_space<vmem>>, vector<1x1x8xf32>,
    return
  }
  func.func @transform_0(%arg0: i32) -> (i32, i32) {
    %c0_i32 = arith.constant 0 : i32
    %c0_i32_0 = arith.constant 0 : i32
    return %arg0, %c0_i32 : i32, i32
  }
  func.func @transform_1(%arg0: i32) -> (i32, i32) {
    %c0_i32 = arith.constant 0 : i32
    %c0_i32_0 = arith.constant 0 : i32
    %c0_i32_1 = arith.constant 0 : i32
    return %c0_i32, %c0_i32_0 : i32, i32
  }
  func.func @transform_2(%arg0: i32) -> (i32, i32) {
    %c0_i32 = arith.constant 0 : i32
    %c0_i32_0 = arith.constant 0 : i32
    %c0_i32_1 = arith.constant 0 : i32
    return %c0_i32, %c0_i32_0 : i32, i32
  }
  func.func @transform_3(%arg0: i32) -> (i32, i32) {
    %c0_i32 = arith.constant 0 : i32
    %c0_i32_0 = arith.constant 0 : i32
    %c0_i32_1 = arith.constant 0 : i32
    return %c0_i32, %c0_i32_0 : i32, i32
  }
  func.func @transform_4(%arg0: i32) -> (i32, i32) {
    %c0_i32 = arith.constant 0 : i32
    %c0_i32_0 = arith.constant 0 : i32
    %c0_i32_1 = arith.constant 0 : i32
    return %c0_i32, %c0_i32_0 : i32, i32
  }
  func.func @transform_5(%arg0: i32) -> (i32, i32) {
    %c0_i32 = arith.constant 0 : i32
    %c0_i32_0 = arith.constant 0 : i32
    %c0_i32_1 = arith.constant 0 : i32
    return %c0_i32, %c0_i32_0 : i32, i32
  }
  func.func @transform_6(%arg0: i32) -> (i32, i32, i32) {
    %c0_i32 = arith.constant 0 : i32
    %c0_i32_0 = arith.constant 0 : i32
    %c0_i32_1 = arith.constant 0 : i32
    return %arg0, %c0_i32, %c0_i32_0 : i32, i32, i32
  }
}

</mosaic_0001>

<llo_original>
// kernel: tpu_custom_call.1
$region0: #{tpu_custom_call.1}
  #allocation0 [shape = 'u32[]', space=smem, size = 0x4, offset = 0x4, fixed_abs, tag = 'smem constant byte address 0x4 - core index']
  #allocation1 [shape = 'u32[144,128]{1,0:T(1,128)}', space=vmem, size = 0x12000, scoped, tag = 'internal scratch']
  %s0 = inlined_call_operand.hbm [shape: f32[8,130], index: 0, kind: input, shape index: {}]
  %s1 = inlined_call_operand.hbm [shape: bf16[130,256], index: 1, kind: input, shape index: {}]
  %s2 = inlined_call_operand.vmem [shape: f32[1,256], index: 2, kind: input, shape index: {}]
  %s3 = inlined_call_operand.hbm [shape: bf16[256,128], index: 3, kind: input, shape index: {}]
  %s4 = inlined_call_operand.vmem [shape: f32[1,128], index: 4, kind: input, shape index: {}]
  %s5 = inlined_call_operand.vmem [shape: bf16[1,128], index: 5, kind: input, shape index: {}]
  %s6 = inlined_call_operand.hbm [shape: f32[1,1,8], index: 6, kind: output, shape index: {}]
  %s7 = sld [smem:[#allocation0]]
  $region46: #{tpu_custom_call.1} parent=0
    _
  %s9 = ssub.s32 1, %s7
  %s10 = scalar_select 0, %s9, %s7
  $region1: #{tpu_custom_call.1} parent=0
    #allocation2 [shape = 'u8[8192]{0}', space=vmem, size = 0x2000, scoped, tag = 'input window, operand 0, single buffered']
    #allocation3 [shape = 's32[1]{0}', space=sflag, size = 0x4, scoped, tag = 'scoped memory for tpu_custom_call.1']
    #allocation4 [shape = 's32[1]{0}', space=sflag, size = 0x4, scoped, tag = 'scoped memory for tpu_custom_call.1']
    #allocation5 [shape = 'u8[69632]{0}', space=vmem, size = 0x11000, scoped, tag = 'input window, operand 1, single buffered']
    #allocation6 [shape = 's32[1]{0}', space=sflag, size = 0x4, scoped, tag = 'scoped memory for tpu_custom_call.1']
    #allocation7 [shape = 'u8[65536]{0}', space=vmem, size = 0x10000, scoped, tag = 'input window, operand 3, single buffered']
    #allocation8 [shape = 'u8[512]{0}', space=vmem, size = 0x400, scoped, tag = 'output window, operand 0, single buffered']
    %11 = vsyncpa [#allocation3], 0
    %12 = vsyncpa [#allocation6], 0
    %13 = vsyncpa [#allocation4], 0
    // Predicated region
    $region2: #{tpu_custom_call.1} parent=1 // pred_check
      _
    $region3: #{tpu_custom_call.1} parent=1 // pred_check_branch
      %15 = sbr.rel (0) target = $region5
    $region4: #{tpu_custom_call.1} parent=1 // pred_region
      %s17 = ssub.s32 256, 256
      %18 = vsyncadd [#allocation3], %s17
      %s20 = sshll.u32 [#allocation2], 4
      %s21 = int_to_ptr.vmem [resolvable:$true] %s20
      %23 = dma.hbm_to_vmem [thread:$0]  %s0, 256, %s21, [#allocation3]
    $region5: #{tpu_custom_call.1} parent=1 // pred_fallthru
      _
    // Predicated region
    $region6: #{tpu_custom_call.1} parent=1 // pred_check
      _
    $region7: #{tpu_custom_call.1} parent=1 // pred_check_branch
      %25 = sbr.rel (0) target = $region9
    $region8: #{tpu_custom_call.1} parent=1 // pred_region
      %s27 = ssub.s32 2176, 2176
      %28 = vsyncadd [#allocation6], %s27
      %s29 = sshll.u32 [#allocation5], 4
      %s30 = int_to_ptr.vmem [resolvable:$true] %s29
      %35 = dma.hbm_to_vmem [thread:$0]  %s1, 2176, %s30, [#allocation6], 128, 128, 8
    $region9: #{tpu_custom_call.1} parent=1 // pred_fallthru
      _
    // Predicated region
    $region10: #{tpu_custom_call.1} parent=1 // pred_check
      _
    $region11: #{tpu_custom_call.1} parent=1 // pred_check_branch
      %37 = sbr.rel (0) target = $region13
    $region12: #{tpu_custom_call.1} parent=1 // pred_region
      _
    $region13: #{tpu_custom_call.1} parent=1 // pred_fallthru
      _
    // Predicated region
    $region14: #{tpu_custom_call.1} parent=1 // pred_check
      _
    $region15: #{tpu_custom_call.1} parent=1 // pred_check_branch
      %39 = sbr.rel (0) target = $region17
    $region16: #{tpu_custom_call.1} parent=1 // pred_region
      %s41 = ssub.s32 2048, 2048
      %42 = vsyncadd [#allocation6], %s41
      %s43 = sshll.u32 [#allocation7], 4
      %s44 = int_to_ptr.vmem [resolvable:$true] %s43
      %49 = dma.hbm_to_vmem [thread:$0]  %s3, 2048, %s44, [#allocation6], 64, 64, 4
    $region17: #{tpu_custom_call.1} parent=1 // pred_fallthru
      _
    // Predicated region
    $region18: #{tpu_custom_call.1} parent=1 // pred_check
      _
    $region19: #{tpu_custom_call.1} parent=1 // pred_check_branch
      %51 = sbr.rel (0) target = $region21
    $region20: #{tpu_custom_call.1} parent=1 // pred_region
      _
    $region21: #{tpu_custom_call.1} parent=1 // pred_fallthru
      _
    // Predicated region
    $region22: #{tpu_custom_call.1} parent=1 // pred_check
      _
    $region23: #{tpu_custom_call.1} parent=1 // pred_check_branch
      %53 = sbr.rel (0) target = $region25
    $region24: #{tpu_custom_call.1} parent=1 // pred_region
      _
    $region25: #{tpu_custom_call.1} parent=1 // pred_fallthru
      _
    // Predicated region
    $region26: #{tpu_custom_call.1} parent=1 // pred_check
      _
    $region27: #{tpu_custom_call.1} parent=1 // pred_check_branch
      %55 = sbr.rel (0) target = $region29
    $region28: #{tpu_custom_call.1} parent=1 // pred_region
      %56 = dma.done [#allocation3], 256
    $region29: #{tpu_custom_call.1} parent=1 // pred_fallthru
      _
    // Predicated region
    $region30: #{tpu_custom_call.1} parent=1 // pred_check
      _
    $region31: #{tpu_custom_call.1} parent=1 // pred_check_branch
      %58 = sbr.rel (0) target = $region33
    $region32: #{tpu_custom_call.1} parent=1 // pred_region
      %59 = dma.done [#allocation6], 2176
    $region33: #{tpu_custom_call.1} parent=1 // pred_fallthru
      _
    // Predicated region
    $region34: #{tpu_custom_call.1} parent=1 // pred_check
      _
    $region35: #{tpu_custom_call.1} parent=1 // pred_check_branch
      %61 = sbr.rel (0) target = $region37
    $region36: #{tpu_custom_call.1} parent=1 // pred_region
      %62 = dma.done [#allocation6], 2048
    $region37: #{tpu_custom_call.1} parent=1 // pred_fallthru
      _
    %v64 = vld [vmem:[#allocation2] sm:$0xff]
    %v65 = vld [vmem:[#allocation2 + $0x8] sm:$0xff]
    %v66 = vpack.c.bf16 %v64, %v64
    %v67 = vpack.c.bf16 %v65, %v65
    %v68 = vld [vmem:[#allocation5] sm:$0xff]
    %v69 = vld [vmem:[#allocation5 + $0x8] sm:$0xff]
    %v70 = vld [vmem:[#allocation5 + $0x10] sm:$0xff]
    %v71 = vld [vmem:[#allocation5 + $0x18] sm:$0xff]
    %v72 = vld [vmem:[#allocation5 + $0x20] sm:$0xff]
    %v73 = vld [vmem:[#allocation5 + $0x28] sm:$0xff]
    %v74 = vld [vmem:[#allocation5 + $0x30] sm:$0xff]
    %v75 = vld [vmem:[#allocation5 + $0x38] sm:$0xff]
    %v76 = vld [vmem:[#allocation5 + $0x40] sm:$0xff]
    %v77 = vld [vmem:[#allocation5 + $0x48] sm:$0xff]
    %v78 = vld [vmem:[#allocation5 + $0x50] sm:$0xff]
    %v79 = vld [vmem:[#allocation5 + $0x58] sm:$0xff]
    %v80 = vld [vmem:[#allocation5 + $0x60] sm:$0xff]
    %v81 = vld [vmem:[#allocation5 + $0x68] sm:$0xff]
    %v82 = vld [vmem:[#allocation5 + $0x70] sm:$0xff]
    %v83 = vld [vmem:[#allocation5 + $0x78] sm:$0xff]
    %v84 = vld [vmem:[#allocation5 + $0x80] sm:$0x11]
    %v85 = vld [vmem:[%s2] sm:$0x3]
    %v87 = vlaneseq
    %v88 = vshrl.u32 %v87, 7
    %v89 = vsub.s32 0, %v88
    %v90 = vrot.slane %v85, %v89
    %v91 = vlaneseq
    %v92 = vshrl.u32 %v91, 7
    %v93 = vsub.s32 1, %v92
    %v94 = vrot.slane %v85, %v93
    %v114 = vunpack.c.l.b16 %v68
    %v115 = vunpack.c.h.b16 %v68
    %v116 = vunpack.c.l.b16 %v69
    %v117 = vunpack.c.h.b16 %v69
    %v118 = vunpack.c.l.b16 %v70
    %v119 = vunpack.c.h.b16 %v70
    %v120 = vunpack.c.l.b16 %v71
    %v121 = vunpack.c.h.b16 %v71
    %v122 = vunpack.c.l.b16 %v72
    %v123 = vunpack.c.h.b16 %v72
    %v124 = vunpack.c.l.b16 %v73
    %v125 = vunpack.c.h.b16 %v73
    %v126 = vunpack.c.l.b16 %v74
    %v127 = vunpack.c.h.b16 %v74
    %v128 = vunpack.c.l.b16 %v75
    %v129 = vunpack.c.h.b16 %v75
    %v130 = vunpack.c.l.b16 %v76
    %v131 = vunpack.c.h.b16 %v76
    %v132 = vunpack.c.l.b16 %v77
    %v133 = vunpack.c.h.b16 %v77
    %v134 = vunpack.c.l.b16 %v78
    %v135 = vunpack.c.h.b16 %v78
    %v136 = vunpack.c.l.b16 %v79
    %v137 = vunpack.c.h.b16 %v79
    %v138 = vunpack.c.l.b16 %v80
    %v139 = vunpack.c.h.b16 %v80
    %v140 = vunpack.c.l.b16 %v81
    %v141 = vunpack.c.h.b16 %v81
    %v142 = vunpack.c.l.b16 %v82
    %v143 = vunpack.c.h.b16 %v82
    %v144 = vunpack.c.l.b16 %v83
    %v145 = vunpack.c.h.b16 %v83
    %v146 = vunpack.c.l.b16 %v84
    %v147 = vunpack.c.h.b16 %v84
    %v148 = vpack.c.b16 %v116, %v114
    %v149 = vpack.c.b16 %v117, %v115
    %v150 = vpack.c.b16 %v120, %v118
    %v151 = vpack.c.b16 %v121, %v119
    %v152 = vpack.c.b16 %v124, %v122
    %v153 = vpack.c.b16 %v125, %v123
    %v154 = vpack.c.b16 %v128, %v126
    %v155 = vpack.c.b16 %v129, %v127
    %v156 = vpack.c.b16 %v132, %v130
    %v157 = vpack.c.b16 %v133, %v131
    %v158 = vpack.c.b16 %v136, %v134
    %v159 = vpack.c.b16 %v137, %v135
    %v160 = vpack.c.b16 %v140, %v138
    %v161 = vpack.c.b16 %v141, %v139
    %v162 = vpack.c.b16 %v144, %v142
    %v163 = vpack.c.b16 %v145, %v143
    %v164 = vpack.c.b16 %v146, %v146
    %v165 = vpack.c.b16 %v147, %v147
    %vm182 = vcmask 15360
    %v184 = vsel %vm182, %v67, 0
    %vm186 = vcmask 1040384
    %v188 = vsel %vm186, %v164, 0
    %v191 = vsel %vm186, %v165, 0
    %193 = vmatprep.subr.bf16.mxu0 %v149
    %194 = vmatpush1.bf16.msra.mxu0 %v148
    %195 = vmatprep.subr.bf16.mxu0 %v151
    %196 = vmatpush1.bf16.msra.mxu0 %v150
    %197 = vmatprep.subr.bf16.mxu0 %v153
    %198 = vmatpush1.bf16.msra.mxu0 %v152
    %199 = vmatprep.subr.bf16.mxu0 %v155
    %200 = vmatpush1.bf16.msra.mxu0 %v154
    %201 = vmatprep.subr.bf16.mxu0 %v157
    %202 = vmatpush1.bf16.msra.mxu0 %v156
    %203 = vmatprep.subr.bf16.mxu0 %v159
    %204 = vmatpush1.bf16.msra.mxu0 %v158
    %205 = vmatprep.subr.bf16.mxu0 %v161
    %206 = vmatpush1.bf16.msra.mxu0 %v160
    %207 = vmatprep.subr.bf16.mxu0 %v163
    %208 = vmatpush1.bf16.msra.mxu0 %v162
    %209 = vmatprep.subr.bf16.mxu0 %v191
    %210 = vmatpush1.bf16.msra.mxu0 %v188
    %211 = vmatprep.subr.bf16.mxu0 0
    %212 = vmatpush1.bf16.msra.mxu0 0
    %213 = vmatprep.subr.bf16.mxu0 0
    %214 = vmatpush1.bf16.msra.mxu0 0
    %215 = vmatprep.subr.bf16.mxu0 0
    %216 = vmatpush1.bf16.msra.mxu0 0
    %217 = vmatprep.subr.bf16.mxu0 0
    %218 = vmatpush1.bf16.msra.mxu0 0
    %219 = vmatprep.subr.bf16.mxu0 0
    %220 = vmatpush1.bf16.msra.mxu0 0
    %221 = vmatprep.subr.bf16.mxu0 0
    %222 = vmatpush1.bf16.msra.mxu0 0
    %223 = vmatprep.subr.bf16.mxu0 0
    %224 = vmatpush1.bf16.msra.mxu0 0
    %225 = vmatprep.mubr.bf16.mxu0 %v184
    %226 = vmatmul.mubr.bf16.gmra.mrb[0].mxu0 %v66
    %v227 = vpop.f32.mrb[0].mxu0
    %v228 = vadd.f32 %v90, %v227
    %v229 = vpop.f32.mrb[0].mxu0
    %v230 = vadd.f32 %v94, %v229
    %v231 = vpop.f32.mrb[0].mxu0
    %v232 = vpop.f32.mrb[0].mxu0
    %233 = vdwg.mxu0
    %v234 = vmax.f32 %v228, 0.0
    %v235 = vmax.f32 %v230, 0.0
    %v236 = vpack.c.bf16 %v234, %v234
    %v237 = vpack.c.bf16 %v235, %v235
    %v238 = vld [vmem:[#allocation7] sm:$0xf]
    %v239 = vld [vmem:[#allocation7 + $0x4] sm:$0xf]
    %v240 = vld [vmem:[#allocation7 + $0x8] sm:$0xf]
    %v241 = vld [vmem:[#allocation7 + $0xc] sm:$0xf]
    %v242 = vld [vmem:[#allocation7 + $0x10] sm:$0xf]
    %v243 = vld [vmem:[#allocation7 + $0x14] sm:$0xf]
    %v244 = vld [vmem:[#allocation7 + $0x18] sm:$0xf]
    %v245 = vld [vmem:[#allocation7 + $0x1c] sm:$0xf]
    %v246 = vld [vmem:[#allocation7 + $0x20] sm:$0xf]
    %v247 = vld [vmem:[#allocation7 + $0x24] sm:$0xf]
    %v248 = vld [vmem:[#allocation7 + $0x28] sm:$0xf]
    %v249 = vld [vmem:[#allocation7 + $0x2c] sm:$0xf]
    %v250 = vld [vmem:[#allocation7 + $0x30] sm:$0xf]
    %v251 = vld [vmem:[#allocation7 + $0x34] sm:$0xf]
    %v252 = vld [vmem:[#allocation7 + $0x38] sm:$0xf]
    %v253 = vld [vmem:[#allocation7 + $0x3c] sm:$0xf]
    %v254 = vld [vmem:[#allocation7 + $0x40] sm:$0xf]
    %v255 = vld [vmem:[#allocation7 + $0x44] sm:$0xf]
    %v256 = vld [vmem:[#allocation7 + $0x48] sm:$0xf]
    %v257 = vld [vmem:[#allocation7 + $0x4c] sm:$0xf]
    %v258 = vld [vmem:[#allocation7 + $0x50] sm:$0xf]
    %v259 = vld [vmem:[#allocation7 + $0x54] sm:$0xf]
    %v260 = vld [vmem:[#allocation7 + $0x58] sm:$0xf]
    %v261 = vld [vmem:[#allocation7 + $0x5c] sm:$0xf]
    %v262 = vld [vmem:[#allocation7 + $0x60] sm:$0xf]
    %v263 = vld [vmem:[#allocation7 + $0x64] sm:$0xf]
    %v264 = vld [vmem:[#allocation7 + $0x68] sm:$0xf]
    %v265 = vld [vmem:[#allocation7 + $0x6c] sm:$0xf]
    %v266 = vld [vmem:[#allocation7 + $0x70] sm:$0xf]
    %v267 = vld [vmem:[#allocation7 + $0x74] sm:$0xf]
    %v268 = vld [vmem:[#allocation7 + $0x78] sm:$0xf]
    %v269 = vld [vmem:[#allocation7 + $0x7c] sm:$0xf]
    %v270 = vld [vmem:[%s4] sm:$0x1]
    %v272 = vlaneseq
    %v273 = vshrl.u32 %v272, 7
    %v274 = vsub.s32 0, %v273
    %v275 = vrot.slane %v270, %v274
    %v309 = vunpack.c.l.b16 %v238
    %v310 = vunpack.c.l.b16 %v239
    %v311 = vunpack.c.l.b16 %v240
    %v312 = vunpack.c.l.b16 %v241
    %v313 = vunpack.c.l.b16 %v242
    %v314 = vunpack.c.l.b16 %v243
    %v315 = vunpack.c.l.b16 %v244
    %v316 = vunpack.c.l.b16 %v245
    %v317 = vunpack.c.l.b16 %v246
    %v318 = vunpack.c.l.b16 %v247
    %v319 = vunpack.c.l.b16 %v248
    %v320 = vunpack.c.l.b16 %v249
    %v321 = vunpack.c.l.b16 %v250
    %v322 = vunpack.c.l.b16 %v251
    %v323 = vunpack.c.l.b16 %v252
    %v324 = vunpack.c.l.b16 %v253
    %v325 = vunpack.c.l.b16 %v254
    %v326 = vunpack.c.l.b16 %v255
    %v327 = vunpack.c.l.b16 %v256
    %v328 = vunpack.c.l.b16 %v257
    %v329 = vunpack.c.l.b16 %v258
    %v330 = vunpack.c.l.b16 %v259
    %v331 = vunpack.c.l.b16 %v260
    %v332 = vunpack.c.l.b16 %v261
    %v333 = vunpack.c.l.b16 %v262
    %v334 = vunpack.c.l.b16 %v263
    %v335 = vunpack.c.l.b16 %v264
    %v336 = vunpack.c.l.b16 %v265
    %v337 = vunpack.c.l.b16 %v266
    %v338 = vunpack.c.l.b16 %v267
    %v339 = vunpack.c.l.b16 %v268
    %v340 = vunpack.c.l.b16 %v269
    %v341 = vpack.c.b16 %v310, %v309
    %v342 = vpack.c.b16 %v312, %v311
    %v343 = vpack.c.b16 %v314, %v313
    %v344 = vpack.c.b16 %v316, %v315
    %v345 = vpack.c.b16 %v318, %v317
    %v346 = vpack.c.b16 %v320, %v319
    %v347 = vpack.c.b16 %v322, %v321
    %v348 = vpack.c.b16 %v324, %v323
    %v349 = vpack.c.b16 %v326, %v325
    %v350 = vpack.c.b16 %v328, %v327
    %v351 = vpack.c.b16 %v330, %v329
    %v352 = vpack.c.b16 %v332, %v331
    %v353 = vpack.c.b16 %v334, %v333
    %v354 = vpack.c.b16 %v336, %v335
    %v355 = vpack.c.b16 %v338, %v337
    %v356 = vpack.c.b16 %v340, %v339
    %373 = vmatprep.subr.bf16.mxu0 0
    %374 = vmatpush1.bf16.msra.mxu0 %v341
    %375 = vmatprep.subr.bf16.mxu0 0
    %376 = vmatpush1.bf16.msra.mxu0 %v342
    %377 = vmatprep.subr.bf16.mxu0 0
    %378 = vmatpush1.bf16.msra.mxu0 %v343
    %379 = vmatprep.subr.bf16.mxu0 0
    %380 = vmatpush1.bf16.msra.mxu0 %v344
    %381 = vmatprep.subr.bf16.mxu0 0
    %382 = vmatpush1.bf16.msra.mxu0 %v345
    %383 = vmatprep.subr.bf16.mxu0 0
    %384 = vmatpush1.bf16.msra.mxu0 %v346
    %385 = vmatprep.subr.bf16.mxu0 0
    %386 = vmatpush1.bf16.msra.mxu0 %v347
    %387 = vmatprep.subr.bf16.mxu0 0
    %388 = vmatpush1.bf16.msra.mxu0 %v348
    %389 = vmatprep.subr.bf16.mxu0 0
    %390 = vmatpush1.bf16.msra.mxu0 %v349
    %391 = vmatprep.subr.bf16.mxu0 0
    %392 = vmatpush1.bf16.msra.mxu0 %v350
    %393 = vmatprep.subr.bf16.mxu0 0
    %394 = vmatpush1.bf16.msra.mxu0 %v351
    %395 = vmatprep.subr.bf16.mxu0 0
    %396 = vmatpush1.bf16.msra.mxu0 %v352
    %397 = vmatprep.subr.bf16.mxu0 0
    %398 = vmatpush1.bf16.msra.mxu0 %v353
    %399 = vmatprep.subr.bf16.mxu0 0
    %400 = vmatpush1.bf16.msra.mxu0 %v354
    %401 = vmatprep.subr.bf16.mxu0 0
    %402 = vmatpush1.bf16.msra.mxu0 %v355
    %403 = vmatprep.subr.bf16.mxu0 0
    %404 = vmatpush1.bf16.msra.mxu0 %v356
    %405 = vmatprep.mubr.bf16.mxu0 %v237
    %406 = vmatmul.mubr.bf16.gmra.mrb[0].mxu0 %v236
    %v407 = vpop.f32.mrb[0].mxu0
    %v408 = vadd.f32 %v275, %v407
    %v409 = vpop.f32.mrb[0].mxu0
    %v410 = vpop.f32.mrb[0].mxu0
    %v411 = vpop.f32.mrb[0].mxu0
    %412 = vdwg.mxu0
    %v413 = vmax.f32 %v408, 0.0
    %v414 = vld [vmem:[%s5] sm:$0x1]
    %v415 = vpack.c.bf16 %v413, %v413
    %416 = vmatprep.subr.bf16.mxu0 0
    %417 = vmatpush1.bf16.xpose.msra.mxu0 %v415
    %418 = vmatprep.subr.bf16.mxu0 0
    %419 = vmatpush1.bf16.xpose.msra.mxu0 0
    %420 = vmatprep.subr.bf16.mxu0 0
    %421 = vmatpush1.bf16.xpose.msra.mxu0 0
    %422 = vmatprep.subr.bf16.mxu0 0
    %423 = vmatpush1.bf16.xpose.msra.mxu0 0
    %424 = vmatprep.subr.bf16.mxu0 0
    %425 = vmatpush1.bf16.xpose.msra.mxu0 0
    %426 = vmatprep.subr.bf16.mxu0 0
    %427 = vmatpush1.bf16.xpose.msra.mxu0 0
    %428 = vmatprep.subr.bf16.mxu0 0
    %429 = vmatpush1.bf16.xpose.msra.mxu0 0
    %430 = vmatprep.subr.bf16.mxu0 0
    %431 = vmatpush1.bf16.xpose.msra.mxu0 0
    %432 = vmatprep.subr.bf16.mxu0 0
    %433 = vmatpush1.bf16.xpose.msra.mxu0 0
    %434 = vmatprep.subr.bf16.mxu0 0
    %435 = vmatpush1.bf16.xpose.msra.mxu0 0
    %436 = vmatprep.subr.bf16.mxu0 0
    %437 = vmatpush1.bf16.xpose.msra.mxu0 0
    %438 = vmatprep.subr.bf16.mxu0 0
    %439 = vmatpush1.bf16.xpose.msra.mxu0 0
    %440 = vmatprep.subr.bf16.mxu0 0
    %441 = vmatpush1.bf16.xpose.msra.mxu0 0
    %442 = vmatprep.subr.bf16.mxu0 0
    %443 = vmatpush1.bf16.xpose.msra.mxu0 0
    %444 = vmatprep.subr.bf16.mxu0 0
    %445 = vmatpush1.bf16.xpose.msra.mxu0 0
    %446 = vmatprep.subr.bf16.mxu0 0
    %447 = vmatpush1.bf16.xpose.msra.mxu0 0
    %448 = vmatprep.mubr.bf16.mxu0 0
    %449 = vmatmul.mubr.bf16.gmra.mrb[0].mxu0 %v414
    %v450 = vpop.f32.mrb[0].mxu0
    %v451 = vadd.f32 0.0, %v450
    %v452 = vpop.f32.mrb[0].mxu0
    %v453 = vpop.f32.mrb[0].mxu0
    %v454 = vpop.f32.mrb[0].mxu0
    %455 = vdwg.mxu0
    %v456 = vmul.f32 %v451, 0.5
    %v457 = vtanh.pop %v456
    %v458 = vmul.f32 %v457, 0.5
    %v459 = vadd.f32 %v458, 0.5
    %vm460 = vcmask 57344
    %461 = vst.msk [vmem:[#allocation8] sm:$0x1] %vm460, %v459
    // Predicated region
    $region38: #{tpu_custom_call.1} parent=1 // pred_check
      _
    $region39: #{tpu_custom_call.1} parent=1 // pred_check_branch
      %463 = sbr.rel (0) target = $region41
    $region40: #{tpu_custom_call.1} parent=1 // pred_region
      %s465 = ssub.s32 16, 16
      %466 = vsyncadd [#allocation4], %s465
      %s468 = sshll.u32 [#allocation8], 4
      %s469 = int_to_ptr.vmem [resolvable:$true] %s468
      %471 = dma.vmem_to_hbm [thread:$0]  %s469, 16, %s6, [#allocation4]
    $region41: #{tpu_custom_call.1} parent=1 // pred_fallthru
      _
    // Predicated region
    $region42: #{tpu_custom_call.1} parent=1 // pred_check
      _
    $region43: #{tpu_custom_call.1} parent=1 // pred_check_branch
      %473 = sbr.rel (0) target = $region45
    $region44: #{tpu_custom_call.1} parent=1 // pred_region
      %474 = dma.done [#allocation4], 16
    $region45: #{tpu_custom_call.1} parent=1 // pred_fallthru
      _
    %475 = vsyncpa [#allocation3], 1
    %476 = vsyncpa [#allocation6], 1
    %477 = vsyncpa [#allocation4], 1

</llo_original>
